<compile_context>
chip_gen: v5e
topology: v5e:2x2
jax: 0.10.0
libtpu: 0.0.40
codegen_flags: <defaults>
</compile_context>

<pallas_src>
import jax
import jax.numpy as jnp
from jax.experimental import pallas as pl
from jax.experimental.pallas import tpu as pltpu


def _dropx2_kernel(x1_ref, o_ref):
    # Output tile is x1's tile; x2 never enters the pipeline (never DMA'd).
    o_ref[...] = x1_ref[...]


def _block_budget_bytes():
    """Per-block byte budget, generation-aware but conservative."""
    try:
        kind = jax.devices()[0].device_kind.lower()
    except Exception:  # pragma: no cover - defensive
        return 2 * 1024 * 1024
    # v5e: 16 MiB scoped-VMEM default -> keep 2 MiB blocks (8 MiB pipeline).
    if "v5 lite" in kind or "v5e" in kind or "v5lite" in kind:
        return 2 * 1024 * 1024
    # v6e / v7x: 4 MiB blocks -> 16 MiB double-buffered in+out, well inside
    # v6e's 32 MiB scoped default and v7x's 64 MiB physical VMEM.
    return 4 * 1024 * 1024


def _choose_cols(total, last_dim, sublane):
    """Lane-dense column width: multiple of 128 dividing `total`, preferring a
    width whose companion row count is sublane-aligned (so rows tile cleanly)."""
    candidates = (2048, 1024, 512, 256, 128)
    best_any = None
    for cand in candidates:
        if total % cand == 0:
            if best_any is None:
                best_any = cand
            if (total // cand) % sublane == 0:
                return cand
    if best_any is not None:
        return best_any
    # Total not a multiple of 128: keep the natural trailing extent as lanes.
    return max(1, last_dim)


def _dropx2_copy(x1):
    """Materialized streaming copy of x1 (roofline HBM->HBM via VMEM pipeline)."""
    orig_shape = x1.shape
    total = x1.size
    itemsize = jnp.dtype(x1.dtype).itemsize
    sublane = {4: 8, 2: 16, 1: 32}.get(itemsize, 8)
    budget_bytes = _block_budget_bytes()

    cols = _choose_cols(total, orig_shape[-1] if x1.ndim >= 1 else 1, sublane)
    rows = total // cols
    max_rows = max(1, budget_bytes // (cols * itemsize))

    cost = pl.CostEstimate(flops=0, transcendentals=0,
                           bytes_accessed=2 * total * itemsize)
    cparams = pltpu.CompilerParams(dimension_semantics=("parallel",))

    # ---- Preferred 2D path: sublane-aligned row tiles. ----------------------
    tile_rows = None
    t = (min(rows, max_rows) // sublane) * sublane
    while t >= sublane:
        if rows % t == 0:
            tile_rows = t
            break
        t -= sublane

    if tile_rows is not None:
        # Let the "parallel" axis actually split across v7x's two TensorCores
        # when the data allows a grid of >= 2 steps.
        if rows // tile_rows == 1 and rows > tile_rows // 2 >= sublane:
            half = tile_rows // 2
            while half >= sublane:
                if rows % half == 0:
                    tile_rows = half
                    break
                half -= sublane

        grid = (rows // tile_rows,)
        out_2d = pl.pallas_call(
            _dropx2_kernel,
            out_shape=jax.ShapeDtypeStruct((rows, cols), x1.dtype),
            grid_spec=pltpu.PrefetchScalarGridSpec(
                num_scalar_prefetch=0,
                grid=grid,
                in_specs=[pl.BlockSpec((tile_rows, cols), lambda i: (i, 0))],
                out_specs=pl.BlockSpec((tile_rows, cols), lambda i: (i, 0)),
            ),
            compiler_params=cparams,
            cost_estimate=cost,
        )(x1.reshape(rows, cols))
        return out_2d.reshape(orig_shape)

    # ---- Hardened fallback for unaligned row counts. ------------------------
    # View as (g, rows_g, cols) and chunk along the leading axis.  The last two
    # block dims equal the full array dims, so the (8,128) divisibility rule is
    # trivially satisfied, and per-block VMEM stays under the budget (no giant
    # single block that could blow v7x's 64 MiB VMEM).
    divisors = sorted({d for i in range(1, int(rows ** 0.5) + 1) if rows % i == 0
                       for d in (i, rows // i)})
    g = rows  # worst case: one row per block (always fits)
    for cand in divisors:
        if (rows // cand) * cols * itemsize <= budget_bytes:
            g = cand
            break
    rows_g = rows // g

    out_3d = pl.pallas_call(
        _dropx2_kernel,
        out_shape=jax.ShapeDtypeStruct((g, rows_g, cols), x1.dtype),
        grid_spec=pltpu.PrefetchScalarGridSpec(
            num_scalar_prefetch=0,
            grid=(g,),
            in_specs=[pl.BlockSpec((1, rows_g, cols), lambda i: (i, 0, 0))],
            out_specs=pl.BlockSpec((1, rows_g, cols), lambda i: (i, 0, 0)),
        ),
        compiler_params=cparams,
        cost_estimate=cost,
    )(x1.reshape(g, rows_g, cols))
    return out_3d.reshape(orig_shape)


def dropx2_fusion(x1, x2, materialize_copy=False):
    """Pallas equivalent of DropX2Fusion.forward(x1, x2) -> x1 (NCHW inputs).

    Default path is the true identity (no kernel launch, no HBM traffic) —
    this matches the module exactly and is the optimal implementation.  Pass
    materialize_copy=True only if a distinct output buffer is required; that
    path runs a lane-dense streaming-copy kernel that never DMAs x2.
    """
    assert x1.shape == x2.shape, "x1 and x2 must share a shape"
    del x2  # dropped by the module; never touched.
    if not materialize_copy:
        return x1
    return _dropx2_copy(x1)


if __name__ == "__main__":
    key = jax.random.PRNGKey(0)
    k1, k2 = jax.random.split(key)

    # Small NCHW shapes consistent with the module usage.
    B, C, H, W = 2, 4, 16, 16
    x1 = jax.random.normal(k1, (B, C, H, W), dtype=jnp.float32)
    x2 = jax.random.normal(k2, (B, C, H, W), dtype=jnp.float32)

    # Default (optimal) path: pure identity, no kernel launch.
    out_id = jax.block_until_ready(dropx2_fusion(x1, x2))
    assert out_id.shape == x1.shape and out_id.dtype == x1.dtype
    assert bool(jnp.all(out_id == x1))

    # Materialized path: exercise the Pallas streaming-copy kernel once.
    out_copy = jax.block_until_ready(dropx2_fusion(x1, x2, materialize_copy=True))
    assert out_copy.shape == x1.shape and out_copy.dtype == x1.dtype
    assert bool(jnp.all(out_copy == x1))

    print("KERNEL_OK")
</pallas_src>

<mosaic_0001>
module attributes {stable_mosaic.version = 11 : i64} {
  func.func @_dropx2_kernel(%arg0: i32, %arg1: memref<8x256xf32, #tpu.memory_space<vmem>>, %arg2: memref<8x256xf32, #tpu.memory_space<vmem>>) attributes {dimension_semantics = [#tpu.dimension_semantics<parallel>], iteration_bounds = array<i64: 1>, scalar_prefetch = 0 : i64, scratch_operands = 0 : i64, tpu.core_type = #tpu.core_type<tc>, window_params = [{transform_indices = @transform_0, window_bounds = array<i64: 8, 256>}, {transform_indices = @transform_1, window_bounds = array<i64: 8, 256>}]} {
    %c0 = arith.constant 0 : index
    %c0_0 = arith.constant 0 : index
    %0 = vector.load %arg1[%c0, %c0_0] : memref<8x256xf32, #tpu.memory_space<vmem>>, vector<8x256xf32>
    %c0_1 = arith.constant 0 : index
    %c0_2 = arith.constant 0 : index
    %1 = vector.load %arg2[%c0_1, %c0_2] : memref<8x256xf32, #tpu.memory_space<vmem>>, vector<8x256xf32>
    tpu.vector_store %arg2[%c0_1, %c0_2], %0 {strides = array<i32>} : memref<8x256xf32, #tpu.memory_space<vmem>>, vector<8x256xf32>,
    return
  }
  func.func @transform_0(%arg0: i32) -> (i32, i32) {
    %c0_i32 = arith.constant 0 : i32
    %c0_i32_0 = arith.constant 0 : i32
    return %arg0, %c0_i32 : i32, i32
  }
  func.func @transform_1(%arg0: i32) -> (i32, i32) {
    %c0_i32 = arith.constant 0 : i32
    %c0_i32_0 = arith.constant 0 : i32
    return %arg0, %c0_i32 : i32, i32
  }
}

</mosaic_0001>

<llo_original>
// kernel: tpu_custom_call.1
$region0: #{tpu_custom_call.1}
  #allocation0 [shape = 'u32[]', space=smem, size = 0x4, offset = 0x4, fixed_abs, tag = 'smem constant byte address 0x4 - core index']
  #allocation1 [shape = 'u32[72,128]{1,0:T(1,128)}', space=vmem, size = 0x9000, scoped, tag = 'internal scratch']
  %s0 = inlined_call_operand.hbm [shape: f32[8,256], index: 0, kind: input, shape index: {}]
  %s1 = inlined_call_operand.hbm [shape: f32[8,256], index: 1, kind: output, shape index: {}]
  %s2 = sld [smem:[#allocation0]]
  $region18: #{tpu_custom_call.1} parent=0
    _
  %s4 = ssub.s32 1, %s2
  %s5 = scalar_select 0, %s4, %s2
  $region1: #{tpu_custom_call.1} parent=0
    #allocation2 [shape = 'u8[8192]{0}', space=vmem, size = 0x2000, scoped, tag = 'input window, operand 0, single buffered']
    #allocation3 [shape = 's32[1]{0}', space=sflag, size = 0x4, scoped, tag = 'scoped memory for tpu_custom_call.1']
    #allocation4 [shape = 's32[1]{0}', space=sflag, size = 0x4, scoped, tag = 'scoped memory for tpu_custom_call.1']
    #allocation5 [shape = 'u8[8192]{0}', space=vmem, size = 0x2000, scoped, tag = 'output window, operand 0, single buffered']
    %6 = vsyncpa [#allocation3], 0
    %7 = vsyncpa [#allocation4], 0
    // Predicated region
    $region2: #{tpu_custom_call.1} parent=1 // pred_check
      _
    $region3: #{tpu_custom_call.1} parent=1 // pred_check_branch
      %9 = sbr.rel (0) target = $region5
    $region4: #{tpu_custom_call.1} parent=1 // pred_region
      %11 = vsyncadd [#allocation3], 0
      %s13 = sshll.u32 %s0, 4
      %s14 = int_to_ptr.hbm [resolvable:$true] %s13
      %s15 = sshll.u32 [#allocation2], 4
      %s16 = int_to_ptr.vmem [resolvable:$true] %s15
      %18 = dma.hbm_to_vmem [thread:$0]  %s14, 256, %s16, [#allocation3]
    $region5: #{tpu_custom_call.1} parent=1 // pred_fallthru
      _
    // Predicated region
    $region6: #{tpu_custom_call.1} parent=1 // pred_check
      _
    $region7: #{tpu_custom_call.1} parent=1 // pred_check_branch
      %20 = sbr.rel (0) target = $region9
    $region8: #{tpu_custom_call.1} parent=1 // pred_region
      %22 = dma.done [#allocation3], 256
    $region9: #{tpu_custom_call.1} parent=1 // pred_fallthru
      _
    %v23 = vld [vmem:[#allocation2] sm:$0xff]
    %v24 = vld [vmem:[#allocation2 + $0x8] sm:$0xff]
    %25 = vst [vmem:[#allocation5] sm:$0xff] %v23
    %26 = vst [vmem:[#allocation5 + $0x8] sm:$0xff] %v24
    // Predicated region
    $region10: #{tpu_custom_call.1} parent=1 // pred_check
      _
    $region11: #{tpu_custom_call.1} parent=1 // pred_check_branch
      %28 = sbr.rel (0) target = $region13
    $region12: #{tpu_custom_call.1} parent=1 // pred_region
      %30 = vsyncadd [#allocation4], 0
      %s32 = sshll.u32 [#allocation5], 4
      %s33 = int_to_ptr.vmem [resolvable:$true] %s32
      %s34 = sshll.u32 %s1, 4
      %s35 = int_to_ptr.hbm [resolvable:$true] %s34
      %37 = dma.vmem_to_hbm [thread:$0]  %s33, 256, %s35, [#allocation4]
    $region13: #{tpu_custom_call.1} parent=1 // pred_fallthru
      _
    // Predicated region
    $region14: #{tpu_custom_call.1} parent=1 // pred_check
      _
    $region15: #{tpu_custom_call.1} parent=1 // pred_check_branch
      %39 = sbr.rel (0) target = $region17
    $region16: #{tpu_custom_call.1} parent=1 // pred_region
      %41 = dma.done [#allocation4], 256
    $region17: #{tpu_custom_call.1} parent=1 // pred_fallthru
      _
    %42 = vsyncpa [#allocation3], 1
    %43 = vsyncpa [#allocation4], 1

</llo_original>
